<compile_context>
chip_gen: v7x
topology: tpu7x:2x2x1
jax: 0.10.0
libtpu: 0.0.40
codegen_flags: <defaults>
</compile_context>

<pallas_src>
import functools

import jax
import jax.numpy as jnp
from jax.experimental import pallas as pl
from jax.experimental.pallas import tpu as pltpu

IN_DIM = 42      # board features (unpadded in HBM)
HID_DIM = 300    # hidden units
OUT_DIM = 7      # actions (columns) -- also the HBM output width

HID_PAD = 384    # 300 -> 384 (3 * 128) lane-aligned hidden
OUT_PAD = 128    # logits kept lane-dense in VMEM only; just 7 lanes stored

MAX_TB = 512     # row tile for large batches (keeps >=2 grid tiles on v7x)


def _mlp_softmax_kernel(x_ref, w1_ref, b1_ref, w2_ref, b2_ref, o_ref):
    # x_ref : (tb, 42)        bf16     w1_ref: (42, HID_PAD)      bf16
    # b1_ref: (1, HID_PAD)    f32      w2_ref: (HID_PAD, OUT_PAD) bf16
    # b2_ref: (1, OUT_PAD)    f32      o_ref : (tb, OUT_DIM=7)    f32
    x = x_ref[...]

    # Layer 1: bf16 matmul on the MXU, f32 accumulation, f32 bias/ReLU.
    h = jnp.dot(x, w1_ref[...], preferred_element_type=jnp.float32) + b1_ref[...]
    h = jnp.maximum(h, 0.0)

    # Layer 2 (logits). Padded hidden lanes are exactly zero (zero-padded
    # W1 columns / b1) so they contribute nothing.
    logits = jnp.dot(h.astype(jnp.bfloat16), w2_ref[...],
                     preferred_element_type=jnp.float32) + b2_ref[...]

    # Numerically-stable softmax over the 7 real action lanes; padded lanes
    # are excluded from the max and contribute exactly 0 to the denominator
    # (no inf-inf / NaN hazards).
    lane = jax.lax.broadcasted_iota(jnp.int32, logits.shape, dimension=1)
    valid = lane < OUT_DIM
    m = jnp.max(jnp.where(valid, logits, -jnp.inf), axis=-1, keepdims=True)
    e = jnp.where(valid, jnp.exp(logits - m), 0.0)
    denom = jnp.sum(e, axis=-1, keepdims=True)

    # Approximate EUP reciprocal (free slot) + one Newton step for accuracy.
    r = pl.reciprocal(denom, approx=True)
    r = r * (2.0 - denom * r)

    probs = e * r
    # Store only the 7 real action lanes to HBM (narrow vst; 18x less write
    # traffic than a 128-lane output, and no wrapper column slice).
    o_ref[...] = probs[:, :OUT_DIM].astype(o_ref.dtype)


def prepare_params(w1, b1, w2, b2):
    """Pad to lane-aligned shapes and cast weights to bf16 (done ONCE).

    Weight inputs are (in_features, out_features), i.e. transposed relative
    to nn.Linear.weight.
    """
    w1p = jnp.zeros((IN_DIM, HID_PAD), jnp.bfloat16)
    w1p = w1p.at[:, :HID_DIM].set(w1.astype(jnp.bfloat16))
    b1p = jnp.zeros((1, HID_PAD), jnp.float32).at[0, :HID_DIM].set(b1.astype(jnp.float32))
    w2p = jnp.zeros((HID_PAD, OUT_PAD), jnp.bfloat16)
    w2p = w2p.at[:HID_DIM, :OUT_DIM].set(w2.astype(jnp.bfloat16))
    b2p = jnp.zeros((1, OUT_PAD), jnp.float32).at[0, :OUT_DIM].set(b2.astype(jnp.float32))
    return w1p, b1p, w2p, b2p


def _pick_tb(b):
    """Row tile: single minimal tile for small batches, 512 for large ones."""
    rb = max(8, ((b + 7) // 8) * 8)   # f32/bf16 sublane minimum is 8 rows
    return rb if rb <= MAX_TB else MAX_TB


@jax.jit
def direct_policy_agent_mini_forward_batched(x, params):
    """x: (B, 42) boards (any float dtype). Returns (B, 7) softmax probs."""
    w1p, b1p, w2p, b2p = params
    b = x.shape[0]
    tb = _pick_tb(b)
    padded_b = pl.cdiv(b, tb) * tb

    # Single cheap prep op: cast to bf16 (half the input DMA) and, only when
    # needed, pad batch rows with zeros (harmless: sliced off below).
    xb = x.astype(jnp.bfloat16)
    if padded_b != b:
        xb = jnp.pad(xb, ((0, padded_b - b), (0, 0)))

    out = pl.pallas_call(
        _mlp_softmax_kernel,
        out_shape=jax.ShapeDtypeStruct((padded_b, OUT_DIM), jnp.float32),
        grid_spec=pltpu.PrefetchScalarGridSpec(
            num_scalar_prefetch=0,
            grid=(padded_b // tb,),
            in_specs=[
                pl.BlockSpec((tb, IN_DIM), lambda i: (i, 0)),        # x row tile (unpadded lanes)
                pl.BlockSpec((IN_DIM, HID_PAD), lambda i: (0, 0)),   # W1 resident
                pl.BlockSpec((1, HID_PAD), lambda i: (0, 0)),        # b1 resident
                pl.BlockSpec((HID_PAD, OUT_PAD), lambda i: (0, 0)),  # W2 resident
                pl.BlockSpec((1, OUT_PAD), lambda i: (0, 0)),        # b2 resident
            ],
            out_specs=pl.BlockSpec((tb, OUT_DIM), lambda i: (i, 0)), # narrow 7-wide output
        ),
        compiler_params=pltpu.CompilerParams(
            dimension_semantics=("parallel",),  # batch tiles split across v7x TCs
        ),
    )(xb, w1p, b1p, w2p, b2p)

    return out if padded_b == b else out[:b]


def direct_policy_agent_mini_forward(x, params):
    """Single-board convenience wrapper. x: (42,) -> (7,) probabilities."""
    return direct_policy_agent_mini_forward_batched(x.reshape(1, IN_DIM), params)[0]


def init_params(key):
    """PyTorch-style init: U(-1/sqrt(fan_in), 1/sqrt(fan_in)).

    Weights are (in_features, out_features), transposed vs nn.Linear.weight.
    """
    k1, k2, k3, k4 = jax.random.split(key, 4)
    bound1 = 1.0 / jnp.sqrt(float(IN_DIM))
    bound2 = 1.0 / jnp.sqrt(float(HID_DIM))
    w1 = jax.random.uniform(k1, (IN_DIM, HID_DIM), jnp.float32, -bound1, bound1)
    b1 = jax.random.uniform(k2, (HID_DIM,), jnp.float32, -bound1, bound1)
    w2 = jax.random.uniform(k3, (HID_DIM, OUT_DIM), jnp.float32, -bound2, bound2)
    b2 = jax.random.uniform(k4, (OUT_DIM,), jnp.float32, -bound2, bound2)
    return w1, b1, w2, b2


def _reference(x, w1, b1, w2, b2):
    """Plain-JAX reference with the same bf16 quantization of MXU operands."""
    xq = x.astype(jnp.bfloat16).astype(jnp.float32)
    w1q = w1.astype(jnp.bfloat16).astype(jnp.float32)
    w2q = w2.astype(jnp.bfloat16).astype(jnp.float32)
    h = jnp.maximum(xq @ w1q + b1, 0.0)
    logits = h.astype(jnp.bfloat16).astype(jnp.float32) @ w2q + b2
    return jax.nn.softmax(logits, axis=-1)


if __name__ == "__main__":
    key = jax.random.PRNGKey(0)
    k_params, k_x = jax.random.split(key)
    w1, b1, w2, b2 = init_params(k_params)
    params = prepare_params(w1, b1, w2, b2)

    # Small batch of Connect-4-style boards, each flattened to 42 floats.
    B = 8
    x = jax.random.uniform(k_x, (B, IN_DIM), jnp.float32, -1.0, 1.0)

    probs = jax.block_until_ready(direct_policy_agent_mini_forward_batched(x, params))
    probs_ref = _reference(x, w1, b1, w2, b2)

    assert probs.shape == (B, OUT_DIM)
    assert jnp.allclose(jnp.sum(probs, axis=-1), 1.0, atol=1e-4)
    assert jnp.allclose(probs, probs_ref, atol=5e-5, rtol=5e-5)

    # Exercise the batch-row padding path (B not a multiple of 8).
    B2 = 20
    x2 = jax.random.uniform(jax.random.PRNGKey(1), (B2, IN_DIM), jnp.float32, -1.0, 1.0)
    probs2 = jax.block_until_ready(direct_policy_agent_mini_forward_batched(x2, params))
    assert probs2.shape == (B2, OUT_DIM)
    assert jnp.allclose(probs2, _reference(x2, w1, b1, w2, b2), atol=5e-5, rtol=5e-5)

    # Single-board path (original module call shape) matches the batched path.
    p0 = jax.block_until_ready(direct_policy_agent_mini_forward(x[0], params))
    assert p0.shape == (OUT_DIM,)
    assert jnp.allclose(p0, probs[0], atol=5e-5, rtol=5e-5)

    # TODO(synk): select_action's Categorical sampling / legal-move fallback and
    # calculate_rewards are host-side Python bookkeeping, not part of forward().
    print("KERNEL_OK")
</pallas_src>

<mosaic_0001>
module attributes {stable_mosaic.version = 11 : i64} {
  func.func @_mlp_softmax_kernel(%arg0: i32, %arg1: memref<8x42xbf16, #tpu.memory_space<vmem>>, %arg2: memref<42x384xbf16, #tpu.memory_space<vmem>>, %arg3: memref<1x384xf32, #tpu.memory_space<vmem>>, %arg4: memref<384x128xbf16, #tpu.memory_space<vmem>>, %arg5: memref<1x128xf32, #tpu.memory_space<vmem>>, %arg6: memref<8x7xf32, #tpu.memory_space<vmem>>) attributes {dimension_semantics = [#tpu.dimension_semantics<parallel>], iteration_bounds = array<i64: 1>, scalar_prefetch = 0 : i64, scratch_operands = 0 : i64, tpu.core_type = #tpu.core_type<tc>, window_params = [{transform_indices = @transform_0, window_bounds = array<i64: 8, 42>}, {pipeline_mode = #tpu.pipeline_mode<synchronous>, transform_indices = @transform_1, window_bounds = array<i64: 42, 384>}, {pipeline_mode = #tpu.pipeline_mode<synchronous>, transform_indices = @transform_2, window_bounds = array<i64: 1, 384>}, {pipeline_mode = #tpu.pipeline_mode<synchronous>, transform_indices = @transform_3, window_bounds = array<i64: 384, 128>}, {pipeline_mode = #tpu.pipeline_mode<synchronous>, transform_indices = @transform_4, window_bounds = array<i64: 1, 128>}, {transform_indices = @transform_5, window_bounds = array<i64: 8, 7>}]} {
    %c0 = arith.constant 0 : index
    %c0_0 = arith.constant 0 : index
    %0 = vector.load %arg1[%c0, %c0_0] : memref<8x42xbf16, #tpu.memory_space<vmem>>, vector<8x42xbf16>
    %c0_1 = arith.constant 0 : index
    %c0_2 = arith.constant 0 : index
    %1 = vector.load %arg2[%c0_1, %c0_2] : memref<42x384xbf16, #tpu.memory_space<vmem>>, vector<42x384xbf16>
    %cst = arith.constant dense<0.000000e+00> : vector<8x384xf32>
    %2 = tpu.matmul %0, %1, %cst {dimension_numbers = #tpu.dot_dimension_numbers<[1], [0], [0], [1], [0, 0, 1, 1], [], []>} : vector<8x42xbf16>, vector<42x384xbf16>, vector<8x384xf32> -> vector<8x384xf32>
    %c0_3 = arith.constant 0 : index
    %c0_4 = arith.constant 0 : index
    %3 = vector.load %arg3[%c0_3, %c0_4] : memref<1x384xf32, #tpu.memory_space<vmem>>, vector<1x384xf32>
    %4 = vector.broadcast %3 : vector<1x384xf32> to vector<8x384xf32>
    %5 = arith.addf %2, %4 : vector<8x384xf32>
    %cst_5 = arith.constant 0.000000e+00 : f32
    %6 = vector.broadcast %cst_5 : f32 to vector<8x384xf32>
    %7 = arith.maximumf %5, %6 : vector<8x384xf32>
    %8 = arith.truncf %7 : vector<8x384xf32> to vector<8x384xbf16>
    %c0_6 = arith.constant 0 : index
    %c0_7 = arith.constant 0 : index
    %9 = vector.load %arg4[%c0_6, %c0_7] : memref<384x128xbf16, #tpu.memory_space<vmem>>, vector<384x128xbf16>
    %cst_8 = arith.constant dense<0.000000e+00> : vector<8x128xf32>
    %10 = tpu.matmul %8, %9, %cst_8 {dimension_numbers = #tpu.dot_dimension_numbers<[1], [0], [0], [1], [0, 0, 1, 1], [], []>} : vector<8x384xbf16>, vector<384x128xbf16>, vector<8x128xf32> -> vector<8x128xf32>
    %c0_9 = arith.constant 0 : index
    %c0_10 = arith.constant 0 : index
    %11 = vector.load %arg5[%c0_9, %c0_10] : memref<1x128xf32, #tpu.memory_space<vmem>>, vector<1x128xf32>
    %12 = vector.broadcast %11 : vector<1x128xf32> to vector<8x128xf32>
    %13 = arith.addf %10, %12 : vector<8x128xf32>
    %14 = tpu.iota {dimensions = array<i32: 1>} : vector<8x128xi32>
    %c7_i32 = arith.constant 7 : i32
    %15 = vector.broadcast %c7_i32 : i32 to vector<8x128xi32>
    %16 = arith.cmpi slt, %14, %15 : vector<8x128xi32>
    %cst_11 = arith.constant 0xFF800000 : f32
    %17 = vector.broadcast %cst_11 : f32 to vector<8x128xf32>
    %18 = arith.select %16, %13, %17 : vector<8x128xi1>, vector<8x128xf32>
    %cst_12 = arith.constant dense<0xFF800000> : vector<8xf32>
    %19 = vector.multi_reduction <maximumf>, %18, %cst_12 [1] : vector<8x128xf32> to vector<8xf32>
    %20 = vector.shape_cast %19 : vector<8xf32> to vector<8x1xf32>
    %21 = vector.broadcast %20 : vector<8x1xf32> to vector<8x128xf32>
    %22 = arith.subf %13, %21 : vector<8x128xf32>
    %23 = math.exp %22 : vector<8x128xf32>
    %cst_13 = arith.constant 0.000000e+00 : f32
    %24 = vector.broadcast %cst_13 : f32 to vector<8x128xf32>
    %25 = arith.select %16, %23, %24 : vector<8x128xi1>, vector<8x128xf32>
    %cst_14 = arith.constant dense<0.000000e+00> : vector<8xf32>
    %26 = vector.multi_reduction <add>, %25, %cst_14 [1] : vector<8x128xf32> to vector<8xf32>
    %27 = vector.shape_cast %26 : vector<8xf32> to vector<8x1xf32>
    %28 = tpu.reciprocal %27 {approx = true} : vector<8x1xf32> -> vector<8x1xf32>
    %29 = arith.mulf %27, %28 : vector<8x1xf32>
    %cst_15 = arith.constant 2.000000e+00 : f32
    %30 = vector.broadcast %cst_15 : f32 to vector<8x1xf32>
    %31 = arith.subf %30, %29 : vector<8x1xf32>
    %32 = arith.mulf %28, %31 : vector<8x1xf32>
    %33 = vector.broadcast %32 : vector<8x1xf32> to vector<8x128xf32>
    %34 = arith.mulf %25, %33 : vector<8x128xf32>
    %35 = vector.extract_strided_slice %34 {offsets = [0, 0], sizes = [8, 7], strides = [1, 1]} : vector<8x128xf32> to vector<8x7xf32>
    %c0_16 = arith.constant 0 : index
    %c0_17 = arith.constant 0 : index
    %36 = vector.load %arg6[%c0_16, %c0_17] : memref<8x7xf32, #tpu.memory_space<vmem>>, vector<8x7xf32>
    tpu.vector_store %arg6[%c0_16, %c0_17], %35 {strides = array<i32>} : memref<8x7xf32, #tpu.memory_space<vmem>>, vector<8x7xf32>,
    return
  }
  func.func @transform_0(%arg0: i32) -> (i32, i32) {
    %c0_i32 = arith.constant 0 : i32
    %c0_i32_0 = arith.constant 0 : i32
    return %arg0, %c0_i32 : i32, i32
  }
  func.func @transform_1(%arg0: i32) -> (i32, i32) {
    %c0_i32 = arith.constant 0 : i32
    %c0_i32_0 = arith.constant 0 : i32
    %c0_i32_1 = arith.constant 0 : i32
    return %c0_i32, %c0_i32_0 : i32, i32
  }
  func.func @transform_2(%arg0: i32) -> (i32, i32) {
    %c0_i32 = arith.constant 0 : i32
    %c0_i32_0 = arith.constant 0 : i32
    %c0_i32_1 = arith.constant 0 : i32
    return %c0_i32, %c0_i32_0 : i32, i32
  }
  func.func @transform_3(%arg0: i32) -> (i32, i32) {
    %c0_i32 = arith.constant 0 : i32
    %c0_i32_0 = arith.constant 0 : i32
    %c0_i32_1 = arith.constant 0 : i32
    return %c0_i32, %c0_i32_0 : i32, i32
  }
  func.func @transform_4(%arg0: i32) -> (i32, i32) {
    %c0_i32 = arith.constant 0 : i32
    %c0_i32_0 = arith.constant 0 : i32
    %c0_i32_1 = arith.constant 0 : i32
    return %c0_i32, %c0_i32_0 : i32, i32
  }
  func.func @transform_5(%arg0: i32) -> (i32, i32) {
    %c0_i32 = arith.constant 0 : i32
    %c0_i32_0 = arith.constant 0 : i32
    return %arg0, %c0_i32 : i32, i32
  }
}

</mosaic_0001>

<llo_original>
// kernel: direct_policy_agent_mini_forward_batched.1
$region0: #{direct_policy_agent_mini_forward_batched.1}
  #allocation0 [shape = 'u32[]', space=smem, size = 0x4, offset = 0x4, fixed_abs, tag = 'smem constant byte address 0x4 - core index']
  #allocation1 [shape = 'u32[144,128]{1,0:T(1,128)}', space=vmem, size = 0x12000, scoped, tag = 'internal scratch']
  %s0 = inlined_call_operand.vmem [shape: bf16[8,42], index: 0, kind: input, shape index: {}]
  %s1 = inlined_call_operand.hbm [shape: bf16[42,384], index: 1, kind: input, shape index: {}]
  %s2 = inlined_call_operand.vmem [shape: f32[1,384], index: 2, kind: input, shape index: {}]
  %s3 = inlined_call_operand.hbm [shape: bf16[384,128], index: 3, kind: input, shape index: {}]
  %s4 = inlined_call_operand.vmem [shape: f32[1,128], index: 4, kind: input, shape index: {}]
  %s5 = inlined_call_operand.hbm [shape: f32[8,7], index: 5, kind: output, shape index: {}]
  %s6 = sld [smem:[#allocation0]]
  $region38: #{direct_policy_agent_mini_forward_batched.1} parent=0
    _
  %s8 = ssub.s32 1, %s6
  %s9 = scalar_select 0, %s8, %s6
  $region1: #{direct_policy_agent_mini_forward_batched.1} parent=0
    #allocation2 [shape = 'u8[36864]{0}', space=vmem, size = 0x9000, scoped, tag = 'input window, operand 1, single buffered']
    #allocation3 [shape = 's32[1]{0}', space=sflag, size = 0x4, scoped, tag = 'scoped memory for direct_policy_agent_mini_forward_batched.1']
    #allocation4 [shape = 's32[1]{0}', space=sflag, size = 0x4, scoped, tag = 'scoped memory for direct_policy_agent_mini_forward_batched.1']
    #allocation5 [shape = 'u8[98304]{0}', space=vmem, size = 0x18000, scoped, tag = 'input window, operand 3, single buffered']
    #allocation6 [shape = 's32[1]{0}', space=sflag, size = 0x4, scoped, tag = 'scoped memory for direct_policy_agent_mini_forward_batched.1']
    #allocation7 [shape = 'u8[4096]{0}', space=vmem, size = 0x1000, scoped, tag = 'output window, operand 0, single buffered']
    %10 = vsyncpa [#allocation3], 0
    %11 = vsyncpa [#allocation6], 0
    %12 = vsyncpa [#allocation4], 0
    // Predicated region
    $region2: #{direct_policy_agent_mini_forward_batched.1} parent=1 // pred_check
      _
    $region3: #{direct_policy_agent_mini_forward_batched.1} parent=1 // pred_check_branch
      %14 = sbr.rel (0) target = $region5
    $region4: #{direct_policy_agent_mini_forward_batched.1} parent=1 // pred_region
      _
    $region5: #{direct_policy_agent_mini_forward_batched.1} parent=1 // pred_fallthru
      _
    // Predicated region
    $region6: #{direct_policy_agent_mini_forward_batched.1} parent=1 // pred_check
      _
    $region7: #{direct_policy_agent_mini_forward_batched.1} parent=1 // pred_check_branch
      %16 = sbr.rel (0) target = $region9
    $region8: #{direct_policy_agent_mini_forward_batched.1} parent=1 // pred_region
      %s18 = ssub.s32 1152, 1152
      %19 = vsyncadd [#allocation3], %s18
      %s20 = sshll.u32 [#allocation2], 4
      %s21 = int_to_ptr.vmem [resolvable:$true] %s20
      %26 = dma.hbm_to_vmem [thread:$0]  %s1, 1152, %s21, [#allocation3], 192, 192, 12
    $region9: #{direct_policy_agent_mini_forward_batched.1} parent=1 // pred_fallthru
      _
    // Predicated region
    $region10: #{direct_policy_agent_mini_forward_batched.1} parent=1 // pred_check
      _
    $region11: #{direct_policy_agent_mini_forward_batched.1} parent=1 // pred_check_branch
      %28 = sbr.rel (0) target = $region13
    $region12: #{direct_policy_agent_mini_forward_batched.1} parent=1 // pred_region
      _
    $region13: #{direct_policy_agent_mini_forward_batched.1} parent=1 // pred_fallthru
      _
    // Predicated region
    $region14: #{direct_policy_agent_mini_forward_batched.1} parent=1 // pred_check
      _
    $region15: #{direct_policy_agent_mini_forward_batched.1} parent=1 // pred_check_branch
      %30 = sbr.rel (0) target = $region17
    $region16: #{direct_policy_agent_mini_forward_batched.1} parent=1 // pred_region
      %s32 = ssub.s32 3072, 3072
      %33 = vsyncadd [#allocation6], %s32
      %s34 = sshll.u32 [#allocation5], 4
      %s35 = int_to_ptr.vmem [resolvable:$true] %s34
      %40 = dma.hbm_to_vmem [thread:$0]  %s3, 3072, %s35, [#allocation6], 64, 64, 4
    $region17: #{direct_policy_agent_mini_forward_batched.1} parent=1 // pred_fallthru
      _
    // Predicated region
    $region18: #{direct_policy_agent_mini_forward_batched.1} parent=1 // pred_check
      _
    $region19: #{direct_policy_agent_mini_forward_batched.1} parent=1 // pred_check_branch
      %42 = sbr.rel (0) target = $region21
    $region20: #{direct_policy_agent_mini_forward_batched.1} parent=1 // pred_region
      _
    $region21: #{direct_policy_agent_mini_forward_batched.1} parent=1 // pred_fallthru
      _
    // Predicated region
    $region22: #{direct_policy_agent_mini_forward_batched.1} parent=1 // pred_check
      _
    $region23: #{direct_policy_agent_mini_forward_batched.1} parent=1 // pred_check_branch
      %44 = sbr.rel (0) target = $region25
    $region24: #{direct_policy_agent_mini_forward_batched.1} parent=1 // pred_region
      %45 = dma.done [#allocation3], 1152
    $region25: #{direct_policy_agent_mini_forward_batched.1} parent=1 // pred_fallthru
      _
    // Predicated region
    $region26: #{direct_policy_agent_mini_forward_batched.1} parent=1 // pred_check
      _
    $region27: #{direct_policy_agent_mini_forward_batched.1} parent=1 // pred_check_branch
      %47 = sbr.rel (0) target = $region29
    $region28: #{direct_policy_agent_mini_forward_batched.1} parent=1 // pred_region
      %48 = dma.done [#allocation6], 3072
    $region29: #{direct_policy_agent_mini_forward_batched.1} parent=1 // pred_fallthru
      _
    %v50 = vld [vmem:[%s0] sm:$0xf]
    %v51 = vld [vmem:[#allocation2] sm:$0xff]
    %v52 = vld [vmem:[#allocation2 + $0x8] sm:$0xf]
    %v53 = vld [vmem:[#allocation2 + $0xc] sm:$0xff]
    %v54 = vld [vmem:[#allocation2 + $0x14] sm:$0xf]
    %v55 = vld [vmem:[#allocation2 + $0x18] sm:$0xff]
    %v56 = vld [vmem:[#allocation2 + $0x20] sm:$0xf]
    %v57 = vld [vmem:[#allocation2 + $0x24] sm:$0xff]
    %v58 = vld [vmem:[#allocation2 + $0x2c] sm:$0xf]
    %v59 = vld [vmem:[#allocation2 + $0x30] sm:$0xff]
    %v60 = vld [vmem:[#allocation2 + $0x38] sm:$0xf]
    %v61 = vld [vmem:[#allocation2 + $0x3c] sm:$0x11]
    %v62 = vld [vmem:[#allocation2 + $0x44] sm:$0x1]
    %v63 = vld [vmem:[%s2] sm:$0x7]
    %v65 = vlaneseq
    %v66 = vshrl.u32 %v65, 7
    %v67 = vsub.s32 0, %v66
    %v68 = vrot.slane %v63, %v67
    %v69 = vlaneseq
    %v70 = vshrl.u32 %v69, 7
    %v71 = vsub.s32 1, %v70
    %v72 = vrot.slane %v63, %v71
    %v73 = vlaneseq
    %v74 = vshrl.u32 %v73, 7
    %v75 = vsub.s32 2, %v74
    %v76 = vrot.slane %v63, %v75
    %v92 = vunpack.c.l.b16 %v51
    %v93 = vunpack.c.h.b16 %v51
    %v94 = vunpack.c.l.b16 %v52
    %v95 = vunpack.c.l.b16 %v53
    %v96 = vunpack.c.h.b16 %v53
    %v97 = vunpack.c.l.b16 %v54
    %v98 = vunpack.c.l.b16 %v55
    %v99 = vunpack.c.h.b16 %v55
    %v100 = vunpack.c.l.b16 %v56
    %v101 = vunpack.c.l.b16 %v57
    %v102 = vunpack.c.h.b16 %v57
    %v103 = vunpack.c.l.b16 %v58
    %v104 = vunpack.c.l.b16 %v59
    %v105 = vunpack.c.h.b16 %v59
    %v106 = vunpack.c.l.b16 %v60
    %v107 = vunpack.c.l.b16 %v61
    %v108 = vunpack.c.h.b16 %v61
    %v109 = vunpack.c.l.b16 %v62
    %v110 = vpack.c.b16 %v95, %v92
    %v111 = vpack.c.b16 %v96, %v93
    %v112 = vpack.c.b16 %v97, %v94
    %v113 = vpack.c.b16 %v101, %v98
    %v114 = vpack.c.b16 %v102, %v99
    %v115 = vpack.c.b16 %v103, %v100
    %v116 = vpack.c.b16 %v107, %v104
    %v117 = vpack.c.b16 %v108, %v105
    %v118 = vpack.c.b16 %v109, %v106
    %vm125 = vcmask 343040
    %v127 = vsel %vm125, %v50, 0
    %vm129 = vcmask 1044480
    %v131 = vsel %vm129, %v116, 0
    %v134 = vsel %vm129, %v117, 0
    %v137 = vsel %vm129, %v118, 0
    %139 = vmatprep.subr.bf16.mxu0 %v111
    %140 = vmatpush1.bf16.msra.mxu0 %v110
    %141 = vmatprep.subr.bf16.mxu0 %v114
    %142 = vmatpush1.bf16.msra.mxu0 %v113
    %143 = vmatprep.subr.bf16.mxu0 %v134
    %144 = vmatpush1.bf16.msra.mxu0 %v131
    %145 = vmatprep.subr.bf16.mxu0 0
    %146 = vmatpush1.bf16.msra.mxu0 0
    %147 = vmatprep.subr.bf16.mxu0 0
    %148 = vmatpush1.bf16.msra.mxu0 0
    %149 = vmatprep.subr.bf16.mxu0 0
    %150 = vmatpush1.bf16.msra.mxu0 0
    %151 = vmatprep.subr.bf16.mxu0 0
    %152 = vmatpush1.bf16.msra.mxu0 0
    %153 = vmatprep.subr.bf16.mxu0 0
    %154 = vmatpush1.bf16.msra.mxu0 0
    %155 = vmatprep.subr.bf16.mxu0 0
    %156 = vmatpush1.bf16.msra.mxu0 0
    %157 = vmatprep.subr.bf16.mxu0 0
    %158 = vmatpush1.bf16.msra.mxu0 0
    %159 = vmatprep.subr.bf16.mxu0 0
    %160 = vmatpush1.bf16.msra.mxu0 0
    %161 = vmatprep.subr.bf16.mxu0 0
    %162 = vmatpush1.bf16.msra.mxu0 0
    %163 = vmatprep.subr.bf16.mxu0 0
    %164 = vmatpush1.bf16.msra.mxu0 0
    %165 = vmatprep.subr.bf16.mxu0 0
    %166 = vmatpush1.bf16.msra.mxu0 0
    %167 = vmatprep.subr.bf16.mxu0 0
    %168 = vmatpush1.bf16.msra.mxu0 0
    %169 = vmatprep.subr.bf16.mxu0 0
    %170 = vmatpush1.bf16.msra.mxu0 0
    %171 = vmatprep.mubr.bf16.mxu0 0
    %172 = vmatmul.mubr.bf16.gmra.mrb[0].mxu0 %v127
    %v173 = vpop.f32.mrb[0].mxu0
    %v174 = vadd.f32 %v68, %v173
    %v175 = vpop.f32.mrb[0].mxu0
    %v176 = vadd.f32 %v72, %v175
    %v177 = vpop.f32.mrb[0].mxu0
    %v178 = vpop.f32.mrb[0].mxu0
    %179 = vdwg.mxu0
    %180 = vmatprep.subr.bf16.mxu0 0
    %181 = vmatpush1.bf16.msra.mxu0 %v112
    %182 = vmatprep.subr.bf16.mxu0 0
    %183 = vmatpush1.bf16.msra.mxu0 %v115
    %184 = vmatprep.subr.bf16.mxu0 0
    %185 = vmatpush1.bf16.msra.mxu0 %v137
    %186 = vmatprep.subr.bf16.mxu0 0
    %187 = vmatpush1.bf16.msra.mxu0 0
    %188 = vmatprep.subr.bf16.mxu0 0
    %189 = vmatpush1.bf16.msra.mxu0 0
    %190 = vmatprep.subr.bf16.mxu0 0
    %191 = vmatpush1.bf16.msra.mxu0 0
    %192 = vmatprep.subr.bf16.mxu0 0
    %193 = vmatpush1.bf16.msra.mxu0 0
    %194 = vmatprep.subr.bf16.mxu0 0
    %195 = vmatpush1.bf16.msra.mxu0 0
    %196 = vmatprep.subr.bf16.mxu0 0
    %197 = vmatpush1.bf16.msra.mxu0 0
    %198 = vmatprep.subr.bf16.mxu0 0
    %199 = vmatpush1.bf16.msra.mxu0 0
    %200 = vmatprep.subr.bf16.mxu0 0
    %201 = vmatpush1.bf16.msra.mxu0 0
    %202 = vmatprep.subr.bf16.mxu0 0
    %203 = vmatpush1.bf16.msra.mxu0 0
    %204 = vmatprep.subr.bf16.mxu0 0
    %205 = vmatpush1.bf16.msra.mxu0 0
    %206 = vmatprep.subr.bf16.mxu0 0
    %207 = vmatpush1.bf16.msra.mxu0 0
    %208 = vmatprep.subr.bf16.mxu0 0
    %209 = vmatpush1.bf16.msra.mxu0 0
    %210 = vmatprep.subr.bf16.mxu0 0
    %211 = vmatpush1.bf16.msra.mxu0 0
    %212 = vmatprep.mubr.bf16.mxu0 0
    %213 = vmatmul.mubr.bf16.gmra.mrb[0].mxu0 %v127
    %v214 = vpop.f32.mrb[0].mxu0
    %v215 = vadd.f32 %v76, %v214
    %v216 = vpop.f32.mrb[0].mxu0
    %v217 = vpop.f32.mrb[0].mxu0
    %v218 = vpop.f32.mrb[0].mxu0
    %219 = vdwg.mxu0
    %v220 = vmax.f32 %v174, 0.0
    %v221 = vmax.f32 %v176, 0.0
    %v222 = vmax.f32 %v215, 0.0
    %v223 = vpack.c.bf16 %v220, %v220
    %v224 = vpack.c.bf16 %v221, %v221
    %v225 = vpack.c.bf16 %v222, %v222
    %v226 = vld [vmem:[#allocation5] sm:$0xf]
    %v227 = vld [vmem:[#allocation5 + $0x4] sm:$0xf]
    %v228 = vld [vmem:[#allocation5 + $0x8] sm:$0xf]
    %v229 = vld [vmem:[#allocation5 + $0xc] sm:$0xf]
    %v230 = vld [vmem:[#allocation5 + $0x10] sm:$0xf]
    %v231 = vld [vmem:[#allocation5 + $0x14] sm:$0xf]
    %v232 = vld [vmem:[#allocation5 + $0x18] sm:$0xf]
    %v233 = vld [vmem:[#allocation5 + $0x1c] sm:$0xf]
    %v234 = vld [vmem:[#allocation5 + $0x20] sm:$0xf]
    %v235 = vld [vmem:[#allocation5 + $0x24] sm:$0xf]
    %v236 = vld [vmem:[#allocation5 + $0x28] sm:$0xf]
    %v237 = vld [vmem:[#allocation5 + $0x2c] sm:$0xf]
    %v238 = vld [vmem:[#allocation5 + $0x30] sm:$0xf]
    %v239 = vld [vmem:[#allocation5 + $0x34] sm:$0xf]
    %v240 = vld [vmem:[#allocation5 + $0x38] sm:$0xf]
    %v241 = vld [vmem:[#allocation5 + $0x3c] sm:$0xf]
    %v242 = vld [vmem:[#allocation5 + $0x40] sm:$0xf]
    %v243 = vld [vmem:[#allocation5 + $0x44] sm:$0xf]
    %v244 = vld [vmem:[#allocation5 + $0x48] sm:$0xf]
    %v245 = vld [vmem:[#allocation5 + $0x4c] sm:$0xf]
    %v246 = vld [vmem:[#allocation5 + $0x50] sm:$0xf]
    %v247 = vld [vmem:[#allocation5 + $0x54] sm:$0xf]
    %v248 = vld [vmem:[#allocation5 + $0x58] sm:$0xf]
    %v249 = vld [vmem:[#allocation5 + $0x5c] sm:$0xf]
    %v250 = vld [vmem:[#allocation5 + $0x60] sm:$0xf]
    %v251 = vld [vmem:[#allocation5 + $0x64] sm:$0xf]
    %v252 = vld [vmem:[#allocation5 + $0x68] sm:$0xf]
    %v253 = vld [vmem:[#allocation5 + $0x6c] sm:$0xf]
    %v254 = vld [vmem:[#allocation5 + $0x70] sm:$0xf]
    %v255 = vld [vmem:[#allocation5 + $0x74] sm:$0xf]
    %v256 = vld [vmem:[#allocation5 + $0x78] sm:$0xf]
    %v257 = vld [vmem:[#allocation5 + $0x7c] sm:$0xf]
    %v258 = vld [vmem:[#allocation5 + $0x80] sm:$0xf]
    %v259 = vld [vmem:[#allocation5 + $0x84] sm:$0xf]
    %v260 = vld [vmem:[#allocation5 + $0x88] sm:$0xf]
    %v261 = vld [vmem:[#allocation5 + $0x8c] sm:$0xf]
    %v262 = vld [vmem:[#allocation5 + $0x90] sm:$0xf]
    %v263 = vld [vmem:[#allocation5 + $0x94] sm:$0xf]
    %v264 = vld [vmem:[#allocation5 + $0x98] sm:$0xf]
    %v265 = vld [vmem:[#allocation5 + $0x9c] sm:$0xf]
    %v266 = vld [vmem:[#allocation5 + $0xa0] sm:$0xf]
    %v267 = vld [vmem:[#allocation5 + $0xa4] sm:$0xf]
    %v268 = vld [vmem:[#allocation5 + $0xa8] sm:$0xf]
    %v269 = vld [vmem:[#allocation5 + $0xac] sm:$0xf]
    %v270 = vld [vmem:[#allocation5 + $0xb0] sm:$0xf]
    %v271 = vld [vmem:[#allocation5 + $0xb4] sm:$0xf]
    %v272 = vld [vmem:[#allocation5 + $0xb8] sm:$0xf]
    %v273 = vld [vmem:[#allocation5 + $0xbc] sm:$0xf]
    %v274 = vld [vmem:[%s4] sm:$0x1]
    %v276 = vlaneseq
    %v277 = vshrl.u32 %v276, 7
    %v278 = vsub.s32 0, %v277
    %v279 = vrot.slane %v274, %v278
    %v329 = vunpack.c.l.b16 %v226
    %v330 = vunpack.c.l.b16 %v227
    %v331 = vunpack.c.l.b16 %v228
    %v332 = vunpack.c.l.b16 %v229
    %v333 = vunpack.c.l.b16 %v230
    %v334 = vunpack.c.l.b16 %v231
    %v335 = vunpack.c.l.b16 %v232
    %v336 = vunpack.c.l.b16 %v233
    %v337 = vunpack.c.l.b16 %v234
    %v338 = vunpack.c.l.b16 %v235
    %v339 = vunpack.c.l.b16 %v236
    %v340 = vunpack.c.l.b16 %v237
    %v341 = vunpack.c.l.b16 %v238
    %v342 = vunpack.c.l.b16 %v239
    %v343 = vunpack.c.l.b16 %v240
    %v344 = vunpack.c.l.b16 %v241
    %v345 = vunpack.c.l.b16 %v242
    %v346 = vunpack.c.l.b16 %v243
    %v347 = vunpack.c.l.b16 %v244
    %v348 = vunpack.c.l.b16 %v245
    %v349 = vunpack.c.l.b16 %v246
    %v350 = vunpack.c.l.b16 %v247
    %v351 = vunpack.c.l.b16 %v248
    %v352 = vunpack.c.l.b16 %v249
    %v353 = vunpack.c.l.b16 %v250
    %v354 = vunpack.c.l.b16 %v251
    %v355 = vunpack.c.l.b16 %v252
    %v356 = vunpack.c.l.b16 %v253
    %v357 = vunpack.c.l.b16 %v254
    %v358 = vunpack.c.l.b16 %v255
    %v359 = vunpack.c.l.b16 %v256
    %v360 = vunpack.c.l.b16 %v257
    %v361 = vunpack.c.l.b16 %v258
    %v362 = vunpack.c.l.b16 %v259
    %v363 = vunpack.c.l.b16 %v260
    %v364 = vunpack.c.l.b16 %v261
    %v365 = vunpack.c.l.b16 %v262
    %v366 = vunpack.c.l.b16 %v263
    %v367 = vunpack.c.l.b16 %v264
    %v368 = vunpack.c.l.b16 %v265
    %v369 = vunpack.c.l.b16 %v266
    %v370 = vunpack.c.l.b16 %v267
    %v371 = vunpack.c.l.b16 %v268
    %v372 = vunpack.c.l.b16 %v269
    %v373 = vunpack.c.l.b16 %v270
    %v374 = vunpack.c.l.b16 %v271
    %v375 = vunpack.c.l.b16 %v272
    %v376 = vunpack.c.l.b16 %v273
    %v377 = vpack.c.b16 %v330, %v329
    %v378 = vpack.c.b16 %v332, %v331
    %v379 = vpack.c.b16 %v334, %v333
    %v380 = vpack.c.b16 %v336, %v335
    %v381 = vpack.c.b16 %v338, %v337
    %v382 = vpack.c.b16 %v340, %v339
    %v383 = vpack.c.b16 %v342, %v341
    %v384 = vpack.c.b16 %v344, %v343
    %v385 = vpack.c.b16 %v346, %v345
    %v386 = vpack.c.b16 %v348, %v347
    %v387 = vpack.c.b16 %v350, %v349
    %v388 = vpack.c.b16 %v352, %v351
    %v389 = vpack.c.b16 %v354, %v353
    %v390 = vpack.c.b16 %v356, %v355
    %v391 = vpack.c.b16 %v358, %v357
    %v392 = vpack.c.b16 %v360, %v359
    %v393 = vpack.c.b16 %v362, %v361
    %v394 = vpack.c.b16 %v364, %v363
    %v395 = vpack.c.b16 %v366, %v365
    %v396 = vpack.c.b16 %v368, %v367
    %v397 = vpack.c.b16 %v370, %v369
    %v398 = vpack.c.b16 %v372, %v371
    %v399 = vpack.c.b16 %v374, %v373
    %v400 = vpack.c.b16 %v376, %v375
    %425 = vmatprep.subr.bf16.mxu0 0
    %426 = vmatpush1.bf16.msra.mxu0 %v377
    %427 = vmatprep.subr.bf16.mxu0 0
    %428 = vmatpush1.bf16.msra.mxu0 %v378
    %429 = vmatprep.subr.bf16.mxu0 0
    %430 = vmatpush1.bf16.msra.mxu0 %v379
    %431 = vmatprep.subr.bf16.mxu0 0
    %432 = vmatpush1.bf16.msra.mxu0 %v380
    %433 = vmatprep.subr.bf16.mxu0 0
    %434 = vmatpush1.bf16.msra.mxu0 %v381
    %435 = vmatprep.subr.bf16.mxu0 0
    %436 = vmatpush1.bf16.msra.mxu0 %v382
    %437 = vmatprep.subr.bf16.mxu0 0
    %438 = vmatpush1.bf16.msra.mxu0 %v383
    %439 = vmatprep.subr.bf16.mxu0 0
    %440 = vmatpush1.bf16.msra.mxu0 %v384
    %441 = vmatprep.subr.bf16.mxu0 0
    %442 = vmatpush1.bf16.msra.mxu0 %v385
    %443 = vmatprep.subr.bf16.mxu0 0
    %444 = vmatpush1.bf16.msra.mxu0 %v386
    %445 = vmatprep.subr.bf16.mxu0 0
    %446 = vmatpush1.bf16.msra.mxu0 %v387
    %447 = vmatprep.subr.bf16.mxu0 0
    %448 = vmatpush1.bf16.msra.mxu0 %v388
    %449 = vmatprep.subr.bf16.mxu0 0
    %450 = vmatpush1.bf16.msra.mxu0 %v389
    %451 = vmatprep.subr.bf16.mxu0 0
    %452 = vmatpush1.bf16.msra.mxu0 %v390
    %453 = vmatprep.subr.bf16.mxu0 0
    %454 = vmatpush1.bf16.msra.mxu0 %v391
    %455 = vmatprep.subr.bf16.mxu0 0
    %456 = vmatpush1.bf16.msra.mxu0 %v392
    %457 = vmatprep.mubr.bf16.mxu0 %v224
    %458 = vmatmul.mubr.bf16.gmra.mrb[0].mxu0 %v223
    %v459 = vpop.f32.mrb[0].mxu0
    %v460 = vadd.f32 %v279, %v459
    %v461 = vpop.f32.mrb[0].mxu0
    %v462 = vpop.f32.mrb[0].mxu0
    %v463 = vpop.f32.mrb[0].mxu0
    %464 = vdwg.mxu0
    %465 = vmatprep.subr.bf16.mxu0 0
    %466 = vmatpush1.bf16.msra.mxu0 %v393
    %467 = vmatprep.subr.bf16.mxu0 0
    %468 = vmatpush1.bf16.msra.mxu0 %v394
    %469 = vmatprep.subr.bf16.mxu0 0
    %470 = vmatpush1.bf16.msra.mxu0 %v395
    %471 = vmatprep.subr.bf16.mxu0 0
    %472 = vmatpush1.bf16.msra.mxu0 %v396
    %473 = vmatprep.subr.bf16.mxu0 0
    %474 = vmatpush1.bf16.msra.mxu0 %v397
    %475 = vmatprep.subr.bf16.mxu0 0
    %476 = vmatpush1.bf16.msra.mxu0 %v398
    %477 = vmatprep.subr.bf16.mxu0 0
    %478 = vmatpush1.bf16.msra.mxu0 %v399
    %479 = vmatprep.subr.bf16.mxu0 0
    %480 = vmatpush1.bf16.msra.mxu0 %v400
    %481 = vmatprep.subr.bf16.mxu0 0
    %482 = vmatpush1.bf16.msra.mxu0 0
    %483 = vmatprep.subr.bf16.mxu0 0
    %484 = vmatpush1.bf16.msra.mxu0 0
    %485 = vmatprep.subr.bf16.mxu0 0
    %486 = vmatpush1.bf16.msra.mxu0 0
    %487 = vmatprep.subr.bf16.mxu0 0
    %488 = vmatpush1.bf16.msra.mxu0 0
    %489 = vmatprep.subr.bf16.mxu0 0
    %490 = vmatpush1.bf16.msra.mxu0 0
    %491 = vmatprep.subr.bf16.mxu0 0
    %492 = vmatpush1.bf16.msra.mxu0 0
    %493 = vmatprep.subr.bf16.mxu0 0
    %494 = vmatpush1.bf16.msra.mxu0 0
    %495 = vmatprep.subr.bf16.mxu0 0
    %496 = vmatpush1.bf16.msra.mxu0 0
    %497 = vmatprep.mubr.bf16.mxu0 0
    %498 = vmatmul.mubr.bf16.gmra.mrb[0].mxu0 %v225
    %v499 = vpop.f32.mrb[0].mxu0
    %v500 = vadd.f32 %v460, %v499
    %v501 = vpop.f32.mrb[0].mxu0
    %v502 = vpop.f32.mrb[0].mxu0
    %v503 = vpop.f32.mrb[0].mxu0
    %504 = vdwg.mxu0
    %v505 = vlaneseq
    %v506 = vand.u32 %v505, 127
    %vm507 = vcmp.lt.s32.totalorder %v506, 7
    %v508 = vsel %vm507, %v500, -inf
    %509 = vmax.xlane.f32.xlu0 %v508
    %v510 = vpop.xlane.xlu0 %509
    %v511 = vsub.f32 %v500, %v510
    %v512 = vmul.f32 %v511, 1.442695
    %v513 = vpow.pop %v512
    %v514 = vsel %vm507, %v513, 0.0
    %515 = vadd.xlane.f32.xlu0 %v514
    %v516 = vpop.xlane.xlu0 %515
    %v517 = vrcp.pop %v516
    %v518 = vmul.f32 %v516, %v517
    %v519 = vsub.f32 2.0, %v518
    %v520 = vmul.f32 %v517, %v519
    %v521 = vmul.f32 %v514, %v520
    %vm522 = vcmask 56320
    %523 = vst.msk [vmem:[#allocation7] sm:$0xff] %vm522, %v521
    // Predicated region
    $region30: #{direct_policy_agent_mini_forward_batched.1} parent=1 // pred_check
      _
    $region31: #{direct_policy_agent_mini_forward_batched.1} parent=1 // pred_check_branch
      %525 = sbr.rel (0) target = $region33
    $region32: #{direct_policy_agent_mini_forward_batched.1} parent=1 // pred_region
      %s527 = ssub.s32 128, 128
      %528 = vsyncadd [#allocation4], %s527
      %s530 = sshll.u32 [#allocation7], 4
      %s531 = int_to_ptr.vmem [resolvable:$true] %s530
      %533 = dma.vmem_to_hbm [thread:$0]  %s531, 128, %s5, [#allocation4]
    $region33: #{direct_policy_agent_mini_forward_batched.1} parent=1 // pred_fallthru
      _
    // Predicated region
    $region34: #{direct_policy_agent_mini_forward_batched.1} parent=1 // pred_check
      _
    $region35: #{direct_policy_agent_mini_forward_batched.1} parent=1 // pred_check_branch
      %535 = sbr.rel (0) target = $region37
    $region36: #{direct_policy_agent_mini_forward_batched.1} parent=1 // pred_region
      %536 = dma.done [#allocation4], 128
    $region37: #{direct_policy_agent_mini_forward_batched.1} parent=1 // pred_fallthru
      _
    %537 = vsyncpa [#allocation3], 1
    %538 = vsyncpa [#allocation6], 1
    %539 = vsyncpa [#allocation4], 1

</llo_original>
